<compile_context>
chip_gen: v7x
topology: tpu7x:2x2x1
jax: 0.10.0
libtpu: 0.0.40
codegen_flags: <defaults>
</compile_context>

<pallas_src>
import math

import numpy as np
import jax
import jax.numpy as jnp
from jax import lax
from jax.experimental import pallas as pl
from jax.experimental.pallas import tpu as pltpu

_HALF_PI = math.pi / 2.0


# --------------------------- Pallas kernel ----------------------------------
def _pos_emb_kernel(x_ref, w_ref, o_ref):
    # x_ref: (TB, 1)   time value per batch row
    # w_ref: (1, dim)  [w, w] * 2*pi  (weights tiled to full output width)
    # o_ref: (TB, dim)
    #
    # cos(t) == sin(t + pi/2): the phase shift for the second half of the
    # lanes is built in-kernel from a lane iota (compile-time constant), so
    # the body is a lane/sublane broadcast multiply-add, one EUP sine and one
    # unmasked full-width store.
    half_dim = w_ref.shape[1] // 2
    lane = lax.broadcasted_iota(jnp.int32, w_ref.shape, 1)
    phase = jnp.where(lane >= half_dim, jnp.float32(_HALF_PI), jnp.float32(0.0))
    o_ref[...] = jnp.sin(x_ref[...] * w_ref[...] + phase)


# --------------------------- parameter prep (hoisted, run once) --------------
def prepare_weights(weights):
    """Fold the 2*pi scale into the weights and tile them to the full output
    width. Run once when the parameter is set/updated, NOT per forward call."""
    half_dim = weights.shape[0]
    w = weights.astype(jnp.float32) * (2.0 * math.pi)
    return jnp.tile(w, (2,)).reshape(1, 2 * half_dim)


# --------------------------- wrapper -----------------------------------------
def learned_sinusoidal_pos_emb(x, w_tiled, *, batch_block=1024):
    """x: (B,) float32, w_tiled: (1, dim) from prepare_weights -> (B, dim)."""
    B = x.shape[0]
    dim = w_tiled.shape[1]
    x2 = x.astype(jnp.float32).reshape(B, 1)   # 'b -> b 1' (layout plumbing)

    if B >= 2 * batch_block and B % batch_block == 0:
        # Large-batch path: 1-D grid over the batch axis, lane-dense output
        # blocks; "parallel" lets v7x shard the grid across its two TCs.
        return pl.pallas_call(
            _pos_emb_kernel,
            out_shape=jax.ShapeDtypeStruct((B, dim), jnp.float32),
            grid=(B // batch_block,),
            in_specs=[pl.BlockSpec((batch_block, 1), lambda i: (i, 0)),
                      pl.BlockSpec((1, dim), lambda i: (0, 0))],
            out_specs=pl.BlockSpec((batch_block, dim), lambda i: (i, 0)),
            compiler_params=pltpu.CompilerParams(
                dimension_semantics=("parallel",)),
        )(x2, w_tiled)

    # Small-batch path: whole arrays as a single VMEM block, no grid ->
    # no pipeline prologue/epilogue or per-step index bookkeeping.
    # TODO(synk): if dim << 128 in the real config, pad lanes in the consumer
    # (or fuse this op into the time-MLP) to keep stores unmasked.
    return pl.pallas_call(
        _pos_emb_kernel,
        out_shape=jax.ShapeDtypeStruct((B, dim), jnp.float32),
        in_specs=[pl.BlockSpec(memory_space=pltpu.MemorySpace.VMEM),
                  pl.BlockSpec(memory_space=pltpu.MemorySpace.VMEM)],
        out_specs=pl.BlockSpec(memory_space=pltpu.MemorySpace.VMEM),
    )(x2, w_tiled)


# --------------------------- pure-JAX reference ------------------------------
def reference_forward(x, weights):
    freqs = x[:, None] * weights[None, :] * 2.0 * math.pi
    return jnp.concatenate([jnp.sin(freqs), jnp.cos(freqs)], axis=-1)


# --------------------------------- main ---------------------------------------
if __name__ == "__main__":
    key = jax.random.PRNGKey(0)
    kx, kw, kx2 = jax.random.split(key, 3)

    DIM = 128                 # embedding dim (half_dim = 64) -> lane-dense output
    HALF = DIM // 2

    # Parameter: weights ~ N(0, 1) as in torch.randn(half_dim).
    weights = jax.random.normal(kw, (HALF,), jnp.float32)
    # Hoisted out of the per-call path: done once at parameter-set time.
    w_tiled = jax.block_until_ready(prepare_weights(weights))

    emb_fn = jax.jit(learned_sinusoidal_pos_emb, static_argnames=("batch_block",))

    # --- small batch: single block, no grid ----------------------------------
    B = 8
    x = jax.random.uniform(kx, (B,), jnp.float32)   # flow-matching times in [0, 1]
    out = jax.block_until_ready(emb_fn(x, w_tiled))
    ref = jax.block_until_ready(reference_forward(x, weights))
    np.testing.assert_allclose(np.asarray(out), np.asarray(ref),
                               atol=2e-5, rtol=2e-5)

    # --- larger batch: 1-D parallel grid over the batch axis -----------------
    B2 = 64
    x_big = jax.random.uniform(kx2, (B2,), jnp.float32)
    out2 = jax.block_until_ready(emb_fn(x_big, w_tiled, batch_block=16))
    ref2 = jax.block_until_ready(reference_forward(x_big, weights))
    np.testing.assert_allclose(np.asarray(out2), np.asarray(ref2),
                               atol=2e-5, rtol=2e-5)

    print("KERNEL_OK")
</pallas_src>

<mosaic_0001>
module attributes {stable_mosaic.version = 11 : i64} {
  func.func @_pos_emb_kernel(%arg0: memref<8x1xf32, #tpu.memory_space<vmem>>, %arg1: memref<1x128xf32, #tpu.memory_space<vmem>>, %arg2: memref<8x128xf32, #tpu.memory_space<vmem>>) attributes {dimension_semantics = [], scalar_prefetch = 0 : i64, scratch_operands = 0 : i64, tpu.core_type = #tpu.core_type<tc>} {
    %0 = tpu.iota {dimensions = array<i32: 1>} : vector<1x128xi32>
    %c64_i32 = arith.constant 64 : i32
    %1 = vector.broadcast %c64_i32 : i32 to vector<1x128xi32>
    %2 = arith.cmpi sge, %0, %1 : vector<1x128xi32>
    %cst = arith.constant 1.57079637 : f32
    %cst_0 = arith.constant 0.000000e+00 : f32
    %3 = vector.broadcast %cst : f32 to vector<1x128xf32>
    %4 = vector.broadcast %cst_0 : f32 to vector<1x128xf32>
    %5 = arith.select %2, %3, %4 : vector<1x128xi1>, vector<1x128xf32>
    %c0 = arith.constant 0 : index
    %c0_1 = arith.constant 0 : index
    %6 = vector.load %arg0[%c0, %c0_1] : memref<8x1xf32, #tpu.memory_space<vmem>>, vector<8x1xf32>
    %c0_2 = arith.constant 0 : index
    %c0_3 = arith.constant 0 : index
    %7 = vector.load %arg1[%c0_2, %c0_3] : memref<1x128xf32, #tpu.memory_space<vmem>>, vector<1x128xf32>
    %8 = vector.broadcast %6 : vector<8x1xf32> to vector<8x128xf32>
    %9 = vector.broadcast %7 : vector<1x128xf32> to vector<8x128xf32>
    %10 = arith.mulf %8, %9 : vector<8x128xf32>
    %11 = vector.broadcast %5 : vector<1x128xf32> to vector<8x128xf32>
    %12 = arith.addf %10, %11 : vector<8x128xf32>
    %13 = math.sin %12 : vector<8x128xf32>
    %c0_4 = arith.constant 0 : index
    %c0_5 = arith.constant 0 : index
    %14 = vector.load %arg2[%c0_4, %c0_5] : memref<8x128xf32, #tpu.memory_space<vmem>>, vector<8x128xf32>
    tpu.vector_store %arg2[%c0_4, %c0_5], %13 {strides = array<i32>} : memref<8x128xf32, #tpu.memory_space<vmem>>, vector<8x128xf32>,
    return
  }
}

</mosaic_0001>

<llo_original>
// kernel: learned_sinusoidal_pos_emb.1
$region0: #{learned_sinusoidal_pos_emb.1}
  #allocation0 [shape = 'u32[]', space=smem, size = 0x4, offset = 0x4, fixed_abs, tag = 'smem constant byte address 0x4 - core index']
  #allocation1 [shape = 'u32[144,128]{1,0:T(1,128)}', space=vmem, size = 0x12000, scoped, tag = 'internal scratch']
  %s0 = inlined_call_operand.vmem [shape: f32[8,1], index: 0, kind: input, shape index: {}]
  %s1 = inlined_call_operand.vmem [shape: f32[1,128], index: 1, kind: input, shape index: {}]
  %s2 = inlined_call_operand.hbm [shape: f32[8,128], index: 2, kind: output, shape index: {}]
  %s3 = sld [smem:[#allocation0]]
  $region18: #{learned_sinusoidal_pos_emb.1} parent=0
    _
  %s5 = ssub.s32 1, %s3
  %s6 = scalar_select 0, %s5, %s3
  $region1: #{learned_sinusoidal_pos_emb.1} parent=0
    #allocation2 [shape = 'u8[4096]{0}', space=vmem, size = 0x1000, scoped, tag = 'output window, operand 0, single buffered']
    #allocation3 [shape = 's32[1]{0}', space=sflag, size = 0x4, scoped, tag = 'scoped memory for learned_sinusoidal_pos_emb.1']
    %7 = vsyncpa [#allocation3], 0
    // Predicated region
    $region2: #{learned_sinusoidal_pos_emb.1} parent=1 // pred_check
      _
    $region3: #{learned_sinusoidal_pos_emb.1} parent=1 // pred_check_branch
      %9 = sbr.rel (0) target = $region5
    $region4: #{learned_sinusoidal_pos_emb.1} parent=1 // pred_region
      _
    $region5: #{learned_sinusoidal_pos_emb.1} parent=1 // pred_fallthru
      _
    // Predicated region
    $region6: #{learned_sinusoidal_pos_emb.1} parent=1 // pred_check
      _
    $region7: #{learned_sinusoidal_pos_emb.1} parent=1 // pred_check_branch
      %11 = sbr.rel (0) target = $region9
    $region8: #{learned_sinusoidal_pos_emb.1} parent=1 // pred_region
      _
    $region9: #{learned_sinusoidal_pos_emb.1} parent=1 // pred_fallthru
      _
    %v12 = vlaneseq
    %v13 = vand.u32 %v12, 127
    %vm14 = vcmp.ge.s32.totalorder %v13, 64
    %v15 = vsel %vm14, 1.5707964, 0.0
    %v16 = vld [vmem:[%s0] sm:$0xff]
    %v17 = vld [vmem:[%s1] sm:$0x1]
    %19 = vset.pattern.permute.xlu0 0
    %20 = vperm.xlu0 %19, %v16
    %v21 = vpop.permute.xlu0 %20
    %v24 = vlaneseq
    %v25 = vshrl.u32 %v24, 7
    %v26 = vsub.s32 0, %v25
    %v27 = vrot.slane %v17, %v26
    %v29 = vmul.f32 %v21, %v27
    %v30 = vadd.f32 %v29, %v15
    %v31 = vand.u32 2147483647, %v30
    %vm32 = vcmp.le.f32.partialorder %v31, 0.7853982
    %vm33 = vcmp.lt.s32.totalorder %v30, 0
    %v34 = vand.u32 %v30, 2139095040
    %v35 = vshrl.u32 %v34, 23
    %v36 = vsub.s32 %v35, 127
    %v37 = vand.u32 2147483647, %v30
    %v38 = vand.u32 %v37, 8388607
    %v39 = vor.u32 %v38, 8388608
    %v40 = vsub.s32 0, %v39
    %v41 = vadd.s32 %v36, 1
    %vm42 = vcmp.gt.s32.totalorder %v41, 0
    %v43 = vsel %vm42, %v41, 0
    %v44 = vshrl.u32 %v43, 5
    %v45 = vand.u32 %v43, 31
    %v46 = vsub.s32 32, %v45
    %v47 = vshrl.u32 683565275, %v46
    %v48 = vshll.u32 683565275, %v45
    %v49 = vshrl.u32 2475754826, %v46
    %v50 = vor.u32 %v48, %v49
    %v51 = vshll.u32 2475754826, %v45
    %v52 = vshrl.u32 2131351028, %v46
    %v53 = vor.u32 %v51, %v52
    %v54 = vshll.u32 2131351028, %v45
    %v55 = vshrl.u32 2102212464, %v46
    %v56 = vor.u32 %v54, %v55
    %v57 = vshll.u32 2102212464, %v45
    %v58 = vshrl.u32 920167782, %v46
    %v59 = vor.u32 %v57, %v58
    %v60 = vshll.u32 920167782, %v45
    %v61 = vshrl.u32 1326507024, %v46
    %v62 = vor.u32 %v60, %v61
    %vm63 = vcmp.lt.s32.totalorder %v44, 1
    %vm64 = vcmp.lt.s32.totalorder %v44, 2
    %vm65 = vcmp.lt.s32.totalorder %v44, 3
    %vm66 = vcmp.lt.s32.totalorder %v44, 4
    %v67 = vsel %vm63, %v47, %v50
    %v68 = vsel %vm66, %v56, 2102212464
    %v69 = vsel %vm65, %v53, %v68
    %v70 = vsel %vm64, %v67, %v69
    %v71 = vsel %vm63, %v50, %v53
    %v72 = vsel %vm66, %v59, 920167782
    %v73 = vsel %vm65, %v56, %v72
    %v74 = vsel %vm64, %v71, %v73
    %v75 = vsel %vm63, %v53, %v56
    %v76 = vsel %vm66, %v62, 1326507024
    %v77 = vsel %vm65, %v59, %v76
    %v78 = vsel %vm64, %v75, %v77
    %v79 = vshll.u32 %v39, 8
    %v80 = vmul.u32.u64.compose %v79, %v78
    %v81 = vextract.low.u32 %v80
    %v82 = vextract.high.u32 %v80
    %v83 = vmul.u32.u64.compose %v79, %v74
    %v84 = vextract.low.u32 %v83
    %v85 = vextract.high.u32 %v83
    %v86 = vmul.u32 %v79, %v70
    %v87 = vadd.s32 %v82, %v84
    %vm88 = vc.u32 %v82, %v84
    %v89 = vadd.s32 %v85, 1
    %v90 = vsel %vm88, %v89, %v85
    %v91 = vadd.s32 %v86, %v90
    %v92 = vadd.s32 %v91, 536870912
    %v93 = vshrl.u32 %v92, 30
    %v94 = vshll.u32 %v93, 30
    %v95 = vsub.s32 %v91, %v94
    %vm96 = vcmp.lt.s32.totalorder %v95, 0
    %v97 = vsub.s32 0, %v95
    %v98 = vsel %vm96, %v97, %v95
    %v99 = vclz %v98
    %v100 = vsub.s32 %v99, 2
    %vm101 = vcmp.gt.s32.totalorder 0, %v100
    %v102 = vsel %vm101, 0, %v100
    %v103 = vsub.s32 32, %v102
    %v104 = vshll.u32 %v95, %v102
    %v105 = vshrl.u32 %v87, %v103
    %v106 = vor.u32 %v104, %v105
    %v107 = vsub.s32 4294967266, %v102
    %v108 = vadd.s32 %v107, 127
    %v109 = vshll.u32 %v108, 23
    %v110 = vor.u32 4788187, %v109
    %v111 = vand.u32 2147483647, %v110
    %v113 = vcvt.s32.f32 %v106
    %v114 = vmul.f32 %v113, %v111
    %v115 = vxor.u32 %v114, 2147483648
    %v116 = vsel %vm33, %v115, %v114
    %v117 = vsub.s32 4, %v93
    %v118 = vsel %vm33, %v117, %v93
    %v119 = vsel %vm32, %v30, %v116
    %v120 = vsel %vm32, 0, %v118
    %v121 = vcosq.f32.pop %v119
    %v122 = vsinq.f32.pop %v119
    %vm123 = vweird.f32 %v30
    %v124 = vadd.s32 %v120, 3
    %v125 = vand.u32 %v124, 3
    %vm126 = vcmp.lt.s32.totalorder %v125, 2
    %vm127 = vcmp.eq.s32.totalorder %v125, 0
    %v128 = vxor.u32 %v122, 2147483648
    %v129 = vsel %vm127, %v121, %v128
    %vm130 = vcmp.eq.s32.totalorder %v125, 2
    %v131 = vxor.u32 %v121, 2147483648
    %v132 = vsel %vm130, %v131, %v122
    %v133 = vsel %vm126, %v129, %v132
    %v134 = vsel %vm123, nan, %v133
    %135 = vst [vmem:[#allocation2] sm:$0xff] %v134
    // Predicated region
    $region10: #{learned_sinusoidal_pos_emb.1} parent=1 // pred_check
      _
    $region11: #{learned_sinusoidal_pos_emb.1} parent=1 // pred_check_branch
      %137 = sbr.rel (0) target = $region13
    $region12: #{learned_sinusoidal_pos_emb.1} parent=1 // pred_region
      %s139 = ssub.s32 128, 128
      %140 = vsyncadd [#allocation3], %s139
      %s142 = sshll.u32 [#allocation2], 4
      %s143 = int_to_ptr.vmem [resolvable:$true] %s142
      %145 = dma.vmem_to_hbm [thread:$0]  %s143, 128, %s2, [#allocation3]
    $region13: #{learned_sinusoidal_pos_emb.1} parent=1 // pred_fallthru
      _
    // Predicated region
    $region14: #{learned_sinusoidal_pos_emb.1} parent=1 // pred_check
      _
    $region15: #{learned_sinusoidal_pos_emb.1} parent=1 // pred_check_branch
      %147 = sbr.rel (0) target = $region17
    $region16: #{learned_sinusoidal_pos_emb.1} parent=1 // pred_region
      %148 = dma.done [#allocation3], 128
    $region17: #{learned_sinusoidal_pos_emb.1} parent=1 // pred_fallthru
      _
    %149 = vsyncpa [#allocation3], 1

</llo_original>
